<compile_context>
chip_gen: v7x
topology: tpu7x:2x2x1
jax: 0.10.0
libtpu: 0.0.40
codegen_flags: <defaults>
</compile_context>

<pallas_src>
import functools

import jax
import jax.numpy as jnp
from jax.experimental import pallas as pl
from jax.experimental.pallas import tpu as pltpu


def make_diag_mask(size, rad):
    idxs = jnp.arange(size)
    idxdif = jnp.abs(idxs[None, :] - idxs[:, None])
    return ((idxdif <= rad) & (idxdif > 0)).astype(jnp.float32)


def skipgram_kernel(cen_ref, ctx_ref, out_ref, *, seq, nneg, rad, pos_scale, neg_scale):
    # cen_ref: (BB, S, E) bf16 ; ctx_ref: (BB, C_pad, E) bf16 (pos-ctx ++ neg ++ zero-pad)
    # One fused MXU contraction per batch element: sims[b,s,c] = <cen[b,s], ctx[b,c]>
    sims = jnp.einsum("bse,bce->bsc", cen_ref[...], ctx_ref[...],
                      preferred_element_type=jnp.float32)        # (BB, S, C_pad) f32

    # Numerically stable softplus(-x); softplus(x) = x + softplus(-x) so the EUP
    # exp/log1p runs once per element.
    sp_neg = jnp.maximum(-sims, 0.0) + jnp.log1p(jnp.exp(-jnp.abs(sims)))

    # Static loss weights built from iota compares (cheap VPU filler under the MXU/EUP
    # work; no weight inputs to DMA).  BCE mean divisors are pre-folded into the scales,
    # so the kernel's partial is already in final-loss units.
    c_pad = ctx_ref.shape[1]
    s_idx = jax.lax.broadcasted_iota(jnp.int32, (seq, c_pad), 0)
    c_idx = jax.lax.broadcasted_iota(jnp.int32, (seq, c_pad), 1)
    diff = jnp.maximum(c_idx - s_idx, s_idx - c_idx)
    pos_m = (c_idx < seq) & (diff <= rad) & (diff > 0)     # window mask on positive cols
    neg_m = (c_idx >= seq) & (c_idx < seq + nneg)          # negative-sample cols
    w_sp = jnp.where(pos_m, pos_scale, 0.0) + jnp.where(neg_m, neg_scale, 0.0)
    w_lin = jnp.where(neg_m, neg_scale, 0.0)

    # Fused weighted reduction: pos path contributes softplus(-x), neg path contributes
    # x + softplus(-x); padded context columns carry zero weight -> contribute exactly 0.
    total = jnp.sum(w_sp[None, :, :] * sp_neg + w_lin[None, :, :] * sims)

    # Lane-dense, unmasked store of the per-block partial (scalar broadcast).
    out_ref[...] = jnp.full(out_ref.shape, total, jnp.float32)


def skipgram_loss(cen_emb, cem_emb, neg_emb, rad):
    B, S, E = cen_emb.shape
    N = neg_emb.shape[1]

    # Fuse positive-context and negative-sample embeddings into one context tensor,
    # padded on the context axis to a multiple of 8 for clean tiling.
    C = S + N
    C_pad = ((C + 7) // 8) * 8
    cen_bf = cen_emb.astype(jnp.bfloat16)
    ctx_bf = jnp.concatenate([cem_emb, neg_emb], axis=1).astype(jnp.bfloat16)
    if C_pad != C:
        ctx_bf = jnp.pad(ctx_bf, ((0, 0), (0, C_pad - C), (0, 0)))

    # ---- batch-block (BB) selection ---------------------------------------------
    # Per-step VMEM bytes per batch element: double-buffered bf16 inputs plus f32
    # sims/softplus intermediates (x2 slack for temporaries).
    bytes_per_elem = 2 * 2 * (S + C_pad) * E + 4 * 4 * S * C_pad
    vmem_budget = 20 * 1024 * 1024          # conservative: fits v7x 32 MiB scoped VMEM
    bb_cap = max(1, min(2048,               # sweep upper bound per perf review
                        vmem_budget // bytes_per_elem,
                        B // 2 if B >= 2 else 1))   # G >= 2 -> both v7x TCs get work
    BB = 1
    for cand in range(min(bb_cap, B), 0, -1):       # largest divisor of B <= cap
        if B % cand == 0:
            BB = cand
            break
    G = B // BB

    kernel = functools.partial(
        skipgram_kernel, seq=S, nneg=N, rad=rad,
        pos_scale=1.0 / (B * S * S),    # PyTorch BCE mean over the full (B,S,S) grid
        neg_scale=1.0 / (B * S * N))    # BCE-with-logits mean over (B,S,N)

    partials = pl.pallas_call(
        kernel,
        out_shape=jax.ShapeDtypeStruct((G, 8, 128), jnp.float32),
        grid_spec=pltpu.PrefetchScalarGridSpec(
            num_scalar_prefetch=0,
            grid=(G,),
            in_specs=[
                pl.BlockSpec((BB, S, E), lambda i: (i, 0, 0)),      # center embeddings
                pl.BlockSpec((BB, C_pad, E), lambda i: (i, 0, 0)),  # fused context embeddings
            ],
            out_specs=pl.BlockSpec((1, 8, 128), lambda i: (i, 0, 0)),
        ),
        compiler_params=pltpu.CompilerParams(
            dimension_semantics=("parallel",),
            vmem_limit_bytes=32 * 1024 * 1024),
    )(cen_bf, ctx_bf)

    # Tiny cross-block sum; mean divisors are already folded into the kernel weights.
    return jnp.sum(partials[:, 0, 0])


if __name__ == "__main__":
    # Small shapes consistent with the module's forward.
    vsize, esize, sentlen, rad, nsampl = 50, 32, 8, 5, 5
    batch = 2

    key = jax.random.PRNGKey(0)
    k_cen, k_cem, k_sent, k_neg = jax.random.split(key, 4)

    # Deterministic parameter init, mirroring nn.Embedding + uniform(-k, k), row 0 zeroed.
    k = 1.0 / esize
    cenb_w = jax.random.uniform(k_cen, (vsize, esize), jnp.float32, -k, k).at[0].set(0.0)
    cemb_w = jax.random.uniform(k_cem, (vsize, esize), jnp.float32, -k, k).at[0].set(0.0)

    sent = jax.random.randint(k_sent, (batch, sentlen), 0, vsize)
    # TODO(synk): the PyTorch module draws negwords with torch.randint inside forward;
    # here they are sampled deterministically outside the kernel with a fixed JAX key.
    negwords = jax.random.randint(k_neg, (batch, nsampl), 1, vsize)

    # Embedding lookups done in plain JAX (gather); kernel handles the matmuls + loss.
    cen_emb = jnp.take(cenb_w, sent, axis=0)            # (B, S, E)
    cem_emb = jnp.take(cemb_w, sent, axis=0)            # (B, S, E)
    neg_emb = jnp.take(cemb_w, negwords, axis=0)        # (B, N, E)

    loss = jax.block_until_ready(skipgram_loss(cen_emb, cem_emb, neg_emb, rad))

    # Plain-JAX reference check (same bf16 rounding of the inputs as the kernel).
    mask = make_diag_mask(sentlen, rad)                 # (S, S)
    cen_r = cen_emb.astype(jnp.bfloat16).astype(jnp.float32)
    cem_r = cem_emb.astype(jnp.bfloat16).astype(jnp.float32)
    neg_r = neg_emb.astype(jnp.bfloat16).astype(jnp.float32)
    possims = jnp.einsum("bse,bte->bst", cen_r, cem_r)
    negsims = jnp.einsum("bse,bne->bsn", cen_r, neg_r)
    pos_ref = jnp.mean(jnp.where(mask > 0, jax.nn.softplus(-possims), 0.0))
    neg_ref = jnp.mean(jax.nn.softplus(negsims))
    ref = pos_ref + neg_ref
    assert jnp.allclose(loss, ref, rtol=1e-4, atol=1e-5), (loss, ref)

    print("KERNEL_OK")
</pallas_src>

<mosaic_0001>
module attributes {stable_mosaic.version = 11 : i64} {
  func.func @skipgram_kernel(%arg0: i32, %arg1: memref<1x8x32xbf16, #tpu.memory_space<vmem>>, %arg2: memref<1x16x32xbf16, #tpu.memory_space<vmem>>, %arg3: memref<1x8x128xf32, #tpu.memory_space<vmem>>) attributes {dimension_semantics = [#tpu.dimension_semantics<parallel>], iteration_bounds = array<i64: 2>, scalar_prefetch = 0 : i64, scratch_operands = 0 : i64, tpu.core_type = #tpu.core_type<tc>, window_params = [{transform_indices = @transform_0, window_bounds = array<i64: 1, 8, 32>}, {transform_indices = @transform_1, window_bounds = array<i64: 1, 16, 32>}, {transform_indices = @transform_2, window_bounds = array<i64: 1, 8, 128>}]} {
    %c0 = arith.constant 0 : index
    %c0_0 = arith.constant 0 : index
    %c0_1 = arith.constant 0 : index
    %0 = vector.load %arg1[%c0, %c0_0, %c0_1] : memref<1x8x32xbf16, #tpu.memory_space<vmem>>, vector<1x8x32xbf16>
    %c0_2 = arith.constant 0 : index
    %c0_3 = arith.constant 0 : index
    %c0_4 = arith.constant 0 : index
    %1 = vector.load %arg2[%c0_2, %c0_3, %c0_4] : memref<1x16x32xbf16, #tpu.memory_space<vmem>>, vector<1x16x32xbf16>
    "tpu.trace_start"() <{level = 10 : i32, message = "bse,bce->bsc"}> : () -> ()
    %cst = arith.constant dense<0.000000e+00> : vector<1x8x16xf32>
    %2 = tpu.matmul %0, %1, %cst {dimension_numbers = #tpu.dot_dimension_numbers<[2], [2], [1], [1], [0, 0, 0, 1, 1, 1], [0], [0]>} : vector<1x8x32xbf16>, vector<1x16x32xbf16>, vector<1x8x16xf32> -> vector<1x8x16xf32>
    "tpu.trace_stop"() : () -> ()
    %cst_5 = arith.constant 0.000000e+00 : f32
    %3 = vector.broadcast %cst_5 : f32 to vector<1x8x16xf32>
    %4 = arith.subf %3, %2 : vector<1x8x16xf32>
    %cst_6 = arith.constant 0.000000e+00 : f32
    %5 = vector.broadcast %cst_6 : f32 to vector<1x8x16xf32>
    %6 = arith.maximumf %4, %5 : vector<1x8x16xf32>
    %7 = math.absf %2 : vector<1x8x16xf32>
    %cst_7 = arith.constant 0.000000e+00 : f32
    %8 = vector.broadcast %cst_7 : f32 to vector<1x8x16xf32>
    %9 = arith.subf %8, %7 : vector<1x8x16xf32>
    %10 = math.exp %9 : vector<1x8x16xf32>
    %11 = math.log1p %10 : vector<1x8x16xf32>
    %12 = arith.addf %6, %11 : vector<1x8x16xf32>
    %13 = tpu.iota {dimensions = array<i32: 0>} : vector<8x16xi32>
    %14 = tpu.iota {dimensions = array<i32: 1>} : vector<8x16xi32>
    %15 = arith.subi %14, %13 : vector<8x16xi32>
    %16 = arith.subi %13, %14 : vector<8x16xi32>
    %17 = arith.maxsi %15, %16 : vector<8x16xi32>
    %c8_i32 = arith.constant 8 : i32
    %18 = vector.broadcast %c8_i32 : i32 to vector<8x16xi32>
    %19 = arith.cmpi slt, %14, %18 : vector<8x16xi32>
    %c5_i32 = arith.constant 5 : i32
    %20 = vector.broadcast %c5_i32 : i32 to vector<8x16xi32>
    %21 = arith.cmpi sle, %17, %20 : vector<8x16xi32>
    %22 = arith.andi %19, %21 : vector<8x16xi1>
    %c0_i32 = arith.constant 0 : i32
    %23 = vector.broadcast %c0_i32 : i32 to vector<8x16xi32>
    %24 = arith.cmpi sgt, %17, %23 : vector<8x16xi32>
    %25 = arith.andi %22, %24 : vector<8x16xi1>
    %c8_i32_8 = arith.constant 8 : i32
    %26 = vector.broadcast %c8_i32_8 : i32 to vector<8x16xi32>
    %27 = arith.cmpi sge, %14, %26 : vector<8x16xi32>
    %c13_i32 = arith.constant 13 : i32
    %28 = vector.broadcast %c13_i32 : i32 to vector<8x16xi32>
    %29 = arith.cmpi slt, %14, %28 : vector<8x16xi32>
    %30 = arith.andi %27, %29 : vector<8x16xi1>
    %cst_9 = arith.constant 7.812500e-03 : f32
    %cst_10 = arith.constant 0.000000e+00 : f32
    %31 = vector.broadcast %cst_9 : f32 to vector<8x16xf32>
    %32 = vector.broadcast %cst_10 : f32 to vector<8x16xf32>
    %33 = arith.select %25, %31, %32 : vector<8x16xi1>, vector<8x16xf32>
    %cst_11 = arith.constant 1.250000e-02 : f32
    %cst_12 = arith.constant 0.000000e+00 : f32
    %34 = vector.broadcast %cst_11 : f32 to vector<8x16xf32>
    %35 = vector.broadcast %cst_12 : f32 to vector<8x16xf32>
    %36 = arith.select %30, %34, %35 : vector<8x16xi1>, vector<8x16xf32>
    %37 = arith.addf %33, %36 : vector<8x16xf32>
    %cst_13 = arith.constant 1.250000e-02 : f32
    %cst_14 = arith.constant 0.000000e+00 : f32
    %38 = vector.broadcast %cst_13 : f32 to vector<8x16xf32>
    %39 = vector.broadcast %cst_14 : f32 to vector<8x16xf32>
    %40 = arith.select %30, %38, %39 : vector<8x16xi1>, vector<8x16xf32>
    %41 = vector.shape_cast %37 : vector<8x16xf32> to vector<1x8x16xf32>
    %42 = arith.mulf %41, %12 : vector<1x8x16xf32>
    %43 = vector.shape_cast %40 : vector<8x16xf32> to vector<1x8x16xf32>
    %44 = arith.mulf %43, %2 : vector<1x8x16xf32>
    %45 = arith.addf %42, %44 : vector<1x8x16xf32>
    %46 = vector.shape_cast %45 : vector<1x8x16xf32> to vector<1x1x8x16xf32>
    %cst_15 = arith.constant dense<0.000000e+00> : vector<1xf32>
    %47 = vector.multi_reduction <add>, %46, %cst_15 [1, 2, 3] : vector<1x1x8x16xf32> to vector<1xf32>
    %48 = vector.shape_cast %47 : vector<1xf32> to vector<1x1x1x1xf32>
    %49 = vector.extract %48[0, 0, 0, 0] : f32 from vector<1x1x1x1xf32>
    %50 = vector.broadcast %49 : f32 to vector<1x8x128xf32>
    %c0_16 = arith.constant 0 : index
    %c0_17 = arith.constant 0 : index
    %c0_18 = arith.constant 0 : index
    %51 = vector.load %arg3[%c0_16, %c0_17, %c0_18] : memref<1x8x128xf32, #tpu.memory_space<vmem>>, vector<1x8x128xf32>
    tpu.vector_store %arg3[%c0_16, %c0_17, %c0_18], %50 {strides = array<i32>} : memref<1x8x128xf32, #tpu.memory_space<vmem>>, vector<1x8x128xf32>,
    return
  }
  func.func @transform_0(%arg0: i32) -> (i32, i32, i32) {
    %c0_i32 = arith.constant 0 : i32
    %c0_i32_0 = arith.constant 0 : i32
    %c0_i32_1 = arith.constant 0 : i32
    return %arg0, %c0_i32, %c0_i32_0 : i32, i32, i32
  }
  func.func @transform_1(%arg0: i32) -> (i32, i32, i32) {
    %c0_i32 = arith.constant 0 : i32
    %c0_i32_0 = arith.constant 0 : i32
    %c0_i32_1 = arith.constant 0 : i32
    return %arg0, %c0_i32, %c0_i32_0 : i32, i32, i32
  }
  func.func @transform_2(%arg0: i32) -> (i32, i32, i32) {
    %c0_i32 = arith.constant 0 : i32
    %c0_i32_0 = arith.constant 0 : i32
    %c0_i32_1 = arith.constant 0 : i32
    return %arg0, %c0_i32, %c0_i32_0 : i32, i32, i32
  }
}

</mosaic_0001>

<llo_original>
// kernel: tpu_custom_call.1
$region0: #{tpu_custom_call.1}
  #allocation0 [shape = 'u32[]', space=smem, size = 0x4, offset = 0x4, fixed_abs, tag = 'smem constant byte address 0x4 - core index']
  #allocation1 [shape = 'u32[144,128]{1,0:T(1,128)}', space=vmem, size = 0x12000, scoped, tag = 'internal scratch']
  %s0 = inlined_call_operand.hbm [shape: bf16[2,8,32], index: 0, kind: input, shape index: {}]
  %s1 = inlined_call_operand.hbm [shape: bf16[2,16,32], index: 1, kind: input, shape index: {}]
  %s2 = inlined_call_operand.hbm [shape: f32[2,8,128], index: 2, kind: output, shape index: {}]
  %s3 = sld [smem:[#allocation0]]
  $region49: #{tpu_custom_call.1} parent=0
    _
  %s5 = ssub.s32 1, %s3
  %s6 = scalar_select 0, %s5, %s3
  $region1: #{tpu_custom_call.1} parent=0
    #allocation2 [shape = 'u8[4096]{0}', space=vmem, size = 0x1000, scoped, tag = 'input window, operand 0']
    #allocation3 [shape = 's32[2]{0}', space=sflag, size = 0x8, scoped, tag = 'scoped memory for tpu_custom_call.1']
    #allocation4 [shape = 's32[2]{0}', space=sflag, size = 0x8, scoped, tag = 'scoped memory for tpu_custom_call.1']
    #allocation5 [shape = 'u8[8192]{0}', space=vmem, size = 0x2000, scoped, tag = 'input window, operand 1']
    #allocation6 [shape = 's32[2]{0}', space=sflag, size = 0x8, scoped, tag = 'scoped memory for tpu_custom_call.1']
    #allocation7 [shape = 'u8[8192]{0}', space=vmem, size = 0x2000, scoped, tag = 'output window, operand 0']
    %7 = vsyncpa [#allocation3], 0
    %s8 = scalar_lea.sflag [#allocation3], 1
    %9 = vsyncpa %s8, 0
    %10 = vsyncpa [#allocation6], 0
    %s11 = scalar_lea.sflag [#allocation6], 1
    %12 = vsyncpa %s11, 0
    %13 = vsyncpa [#allocation4], 0
    %s14 = scalar_lea.sflag [#allocation4], 1
    %15 = vsyncpa %s14, 0
    loop: start=0, step=1, limit=4
    $region2: #{tpu_custom_call.1} parent=1 // loop_pre_header
      _
    $region3: #{tpu_custom_call.1} parent=1 // loop_header
      %s17 = sphi 0, %s21
      %p18 = scmp.ge.s32.totalorder %s17, 4
      %s27 = sphi 0, %s29
      %s30 = sphi 0, %s27
      %s31 = sphi 0, %s30
      %s47 = sphi 0, %s31
      %s53 = sphi 0, %s55
      %s56 = sphi 0, %s53
      %s57 = sphi 0, %s56
      %s73 = sphi 0, %s57
      %s79 = sphi 0, %s81
      %s82 = sphi 0, %s79
      %s83 = sphi 0, %s82
      %s99 = sphi 0, %s83
    $region4: #{tpu_custom_call.1} parent=1 // loop_header_branch
      %20 = sbr.rel (%p18) target = $region8
    $region5: #{tpu_custom_call.1} parent=1 // loop_body
      %s22 = ssub.s32 %s17, 1
      %s23 = ssub.s32 %s17, 2
      %s24 = sadd.s32 %s17, 1
      %s25 = ssub.s32 %s17, %s24
      %p26 = scmp.eq.s32.totalorder %s25, 0
      %s28 = sadd.s32 %s27, 1
      %s29 = scalar_select %p26, %s27, %s28
      %p32 = pneg %p26
      %p33 = scmp.eq.s32.totalorder %s17, 1
      %p34 = por %p32, %p33
      %p35 = scmp.ne.s32.totalorder %s27, %s30
      %p36 = scmp.eq.s32.totalorder %s17, 0
      %p37 = por %p35, %p36
      %p38 = scmp.ne.s32.totalorder %s27, %s30
      %p39 = scmp.eq.s32.totalorder %s22, 1
      %p40 = por %p38, %p39
      %p41 = scmp.ne.s32.totalorder %s30, %s31
      %p42 = scmp.eq.s32.totalorder %s22, 0
      %p43 = por %p41, %p42
      %p44 = scmp.ne.s32.totalorder %s30, %s31
      %p45 = scmp.eq.s32.totalorder %s23, 1
      %p46 = por %p44, %p45
      %p48 = scmp.ne.s32.totalorder %s31, %s47
      %p49 = scmp.eq.s32.totalorder %s23, 0
      %p50 = por %p48, %p49
      %s51 = ssub.s32 %s17, %s24
      %p52 = scmp.eq.s32.totalorder %s51, 0
      %s54 = sadd.s32 %s53, 1
      %s55 = scalar_select %p52, %s53, %s54
      %p58 = pneg %p52
      %p59 = scmp.eq.s32.totalorder %s17, 1
      %p60 = por %p58, %p59
      %p61 = scmp.ne.s32.totalorder %s53, %s56
      %p62 = scmp.eq.s32.totalorder %s17, 0
      %p63 = por %p61, %p62
      %p64 = scmp.ne.s32.totalorder %s53, %s56
      %p65 = scmp.eq.s32.totalorder %s22, 1
      %p66 = por %p64, %p65
      %p67 = scmp.ne.s32.totalorder %s56, %s57
      %p68 = scmp.eq.s32.totalorder %s22, 0
      %p69 = por %p67, %p68
      %p70 = scmp.ne.s32.totalorder %s56, %s57
      %p71 = scmp.eq.s32.totalorder %s23, 1
      %p72 = por %p70, %p71
      %p74 = scmp.ne.s32.totalorder %s57, %s73
      %p75 = scmp.eq.s32.totalorder %s23, 0
      %p76 = por %p74, %p75
      %s77 = ssub.s32 %s17, %s24
      %p78 = scmp.eq.s32.totalorder %s77, 0
      %s80 = sadd.s32 %s79, 1
      %s81 = scalar_select %p78, %s79, %s80
      %p84 = pneg %p78
      %p85 = scmp.eq.s32.totalorder %s17, 1
      %p86 = por %p84, %p85
      %p87 = scmp.ne.s32.totalorder %s79, %s82
      %p88 = scmp.eq.s32.totalorder %s17, 0
      %p89 = por %p87, %p88
      %p90 = scmp.ne.s32.totalorder %s79, %s82
      %p91 = scmp.eq.s32.totalorder %s22, 1
      %p92 = por %p90, %p91
      %p93 = scmp.ne.s32.totalorder %s82, %s83
      %p94 = scmp.eq.s32.totalorder %s22, 0
      %p95 = por %p93, %p94
      %p96 = scmp.ne.s32.totalorder %s82, %s83
      %p97 = scmp.eq.s32.totalorder %s23, 1
      %p98 = por %p96, %p97
      %p100 = scmp.ne.s32.totalorder %s83, %s99
      %p101 = scmp.eq.s32.totalorder %s23, 0
      %p102 = por %p100, %p101
      %p103 = scmp.le.s32.totalorder 1, %s17
      %p104 = scmp.lt.s32.totalorder %s17, 3
      %p105 = pnand %p103, %p104
      %p106 = pneg %p105
      // Predicated region
      $region9: #{tpu_custom_call.1} parent=5 // pred_check
        _
      $region10: #{tpu_custom_call.1} parent=5 // pred_check_branch
        %108 = sbr.rel (%p105) target = $region12
      $region11: #{tpu_custom_call.1} parent=5 // pred_region
        %s109 = ssub.s32 %s17, 1
      $region12: #{tpu_custom_call.1} parent=5 // pred_fallthru
        _
      %p110 = scmp.lt.s32.totalorder %s17, 2
      // Predicated region
      $region13: #{tpu_custom_call.1} parent=5 // pred_check
        %p111 = pneg %p110
      $region14: #{tpu_custom_call.1} parent=5 // pred_check_branch
        %113 = sbr.rel (%p111) target = $region16
      $region15: #{tpu_custom_call.1} parent=5 // pred_region
        // Predicated region
        $region17: #{tpu_custom_call.1} parent=15 // pred_check
          %p114 = pneg %p37
        $region18: #{tpu_custom_call.1} parent=15 // pred_check_branch
          %116 = sbr.rel (%p114) target = $region20
        $region19: #{tpu_custom_call.1} parent=15 // pred_region
          %s117 = sand.u32 %s27, 1
          %s118 = scalar_lea.sflag [#allocation3], %s117
          %s119 = sand.u32 %s27, 1
          %s120 = smul.addr %s119, 4
          %s121 = scalar_lea.vmem [#allocation2], %s120
          %s123 = ssub.s32 64, 64
          %124 = vsyncadd %s118, %s123
          %s125 = smul.addr %s17, 64
          %s126 = scalar_lea.hbm %s0, %s125
          %s128 = sshll.u32 %s121, 4
          %s129 = int_to_ptr.vmem [resolvable:$true] %s128
          %131 = dma.hbm_to_vmem [thread:$0]  %s126, 64, %s129, %s118
        $region20: #{tpu_custom_call.1} parent=15 // pred_fallthru
          _
        // Predicated region
        $region21: #{tpu_custom_call.1} parent=15 // pred_check
          %p132 = pneg %p63
        $region22: #{tpu_custom_call.1} parent=15 // pred_check_branch
          %134 = sbr.rel (%p132) target = $region24
        $region23: #{tpu_custom_call.1} parent=15 // pred_region
          %s135 = sand.u32 %s53, 1
          %s136 = scalar_lea.sflag [#allocation6], %s135
          %s137 = sand.u32 %s53, 1
          %s138 = smul.addr %s137, 8
          %s139 = scalar_lea.vmem [#allocation5], %s138
          %s141 = ssub.s32 128, 128
          %142 = vsyncadd %s136, %s141
          %s143 = smul.addr %s17, 2
          %s144 = smul.addr %s143, 64
          %s145 = scalar_lea.hbm %s1, %s144
          %s146 = sshll.u32 %s139, 4
          %s147 = int_to_ptr.vmem [resolvable:$true] %s146
          %152 = dma.hbm_to_vmem [thread:$0]  %s145, 128, %s147, %s136, 64, 64, 4
        $region24: #{tpu_custom_call.1} parent=15 // pred_fallthru
          _
      $region16: #{tpu_custom_call.1} parent=5 // pred_fallthru
        _
      %p153 = scmp.le.s32.totalorder 1, %s17
      %p154 = scmp.lt.s32.totalorder %s17, 3
      %p155 = pnand %p153, %p154
      %p156 = pneg %p155
      // Predicated region
      $region25: #{tpu_custom_call.1} parent=5 // pred_check
        _
      $region26: #{tpu_custom_call.1} parent=5 // pred_check_branch
        %158 = sbr.rel (%p155) target = $region28
      $region27: #{tpu_custom_call.1} parent=5 // pred_region
        %s159 = ssub.s32 %s17, 1
        %s160 = sand.u32 %s30, 1
        %s161 = scalar_lea.sflag [#allocation3], %s160
        %s162 = sand.u32 %s30, 1
        %s163 = smul.addr %s162, 4
        %s164 = scalar_lea.vmem [#allocation2], %s163
        // Predicated region
        $region29: #{tpu_custom_call.1} parent=27 // pred_check
          %p165 = pneg %p43
        $region30: #{tpu_custom_call.1} parent=27 // pred_check_branch
          %167 = sbr.rel (%p165) target = $region32
        $region31: #{tpu_custom_call.1} parent=27 // pred_region
          %168 = dma.done %s161, 64
        $region32: #{tpu_custom_call.1} parent=27 // pred_fallthru
          _
        %s169 = sand.u32 %s56, 1
        %s170 = scalar_lea.sflag [#allocation6], %s169
        %s171 = sand.u32 %s56, 1
        %s172 = smul.addr %s171, 8
        %s173 = scalar_lea.vmem [#allocation5], %s172
        // Predicated region
        $region33: #{tpu_custom_call.1} parent=27 // pred_check
          %p174 = pneg %p69
        $region34: #{tpu_custom_call.1} parent=27 // pred_check_branch
          %176 = sbr.rel (%p174) target = $region36
        $region35: #{tpu_custom_call.1} parent=27 // pred_region
          %177 = dma.done %s170, 128
        $region36: #{tpu_custom_call.1} parent=27 // pred_fallthru
          _
        %s178 = sand.u32 %s30, 1
        %s179 = scalar_lea.sflag [#allocation3], %s178
        %s180 = sand.u32 %s30, 1
        %s181 = smul.addr %s180, 4
        %s182 = scalar_lea.vmem [#allocation2], %s181
        %p183 = pneg %p43
        %p184 = pneg %p40
        %s185 = sand.u32 %s56, 1
        %s186 = scalar_lea.sflag [#allocation6], %s185
        %s187 = sand.u32 %s56, 1
        %s188 = smul.addr %s187, 8
        %s189 = scalar_lea.vmem [#allocation5], %s188
        %p190 = pneg %p69
        %p191 = pneg %p66
        %p192 = pneg %p95
        %p193 = pneg %p92
        %s194 = sand.u32 %s82, 1
        %s195 = scalar_lea.sflag [#allocation4], %s194
        %s196 = sand.u32 %s82, 1
        %s197 = smul.addr %s196, 8
        %s198 = scalar_lea.vmem [#allocation7], %s197
        %v200 = vld [vmem:[%s164] sm:$0xf]
        %v201 = vld [vmem:[%s173] sm:$0xf]
        %v202 = vld [vmem:[%s173 + $0x4] sm:$0xf]
        %v205 = vunpack.c.l.b16 %v201
        %v206 = vunpack.c.l.b16 %v202
        %v207 = vpack.c.b16 %v206, %v205
        %vm208 = vcmask 261120
        %v210 = vsel %vm208, %v200, 0
        %v213 = vsel %vm208, %v207, 0
        %215 = vmatprep.subr.bf16.mxu0 0
        %216 = vmatpush1.bf16.xpose.msra.mxu0 %v213
        %217 = vmatprep.subr.bf16.mxu0 0
        %218 = vmatpush1.bf16.xpose.msra.mxu0 0
        %219 = vmatprep.subr.bf16.mxu0 0
        %220 = vmatpush1.bf16.xpose.msra.mxu0 0
        %221 = vmatprep.subr.bf16.mxu0 0
        %222 = vmatpush1.bf16.xpose.msra.mxu0 0
        %223 = vmatprep.subr.bf16.mxu0 0
        %224 = vmatpush1.bf16.xpose.msra.mxu0 0
        %225 = vmatprep.subr.bf16.mxu0 0
        %226 = vmatpush1.bf16.xpose.msra.mxu0 0
        %227 = vmatprep.subr.bf16.mxu0 0
        %228 = vmatpush1.bf16.xpose.msra.mxu0 0
        %229 = vmatprep.subr.bf16.mxu0 0
        %230 = vmatpush1.bf16.xpose.msra.mxu0 0
        %231 = vmatprep.subr.bf16.mxu0 0
        %232 = vmatpush1.bf16.xpose.msra.mxu0 0
        %233 = vmatprep.subr.bf16.mxu0 0
        %234 = vmatpush1.bf16.xpose.msra.mxu0 0
        %235 = vmatprep.subr.bf16.mxu0 0
        %236 = vmatpush1.bf16.xpose.msra.mxu0 0
        %237 = vmatprep.subr.bf16.mxu0 0
        %238 = vmatpush1.bf16.xpose.msra.mxu0 0
        %239 = vmatprep.subr.bf16.mxu0 0
        %240 = vmatpush1.bf16.xpose.msra.mxu0 0
        %241 = vmatprep.subr.bf16.mxu0 0
        %242 = vmatpush1.bf16.xpose.msra.mxu0 0
        %243 = vmatprep.subr.bf16.mxu0 0
        %244 = vmatpush1.bf16.xpose.msra.mxu0 0
        %245 = vmatprep.subr.bf16.mxu0 0
        %246 = vmatpush1.bf16.xpose.msra.mxu0 0
        %247 = vmatprep.mubr.bf16.mxu0 0
        %248 = vmatmul.mubr.bf16.gmra.mrb[0].mxu0 %v210
        %v249 = vpop.f32.mrb[0].mxu0
        %v250 = vadd.f32 0.0, %v249
        %v251 = vpop.f32.mrb[0].mxu0
        %v252 = vpop.f32.mrb[0].mxu0
        %v253 = vpop.f32.mrb[0].mxu0
        %254 = vdwg.mxu0
        %v255 = vsub.f32 0.0, %v250
        %v256 = vmax.f32 %v255, 0.0
        %v257 = vand.u32 2147483647, %v250
        %v258 = vsub.f32 0.0, %v257
        %v259 = vmul.f32 %v258, 1.442695
        %v260 = vpow.pop %v259
        %v261 = vadd.f32 %v260, 1.0
        %v262 = vlog2.pop %v261
        %v263 = vmul.f32 %v262, 0.6931472
        %v264 = vmul.f32 -0.5, %v260
        %v265 = vadd.f32 %v264, 1.0
        %v266 = vmul.f32 %v265, %v260
        %v267 = vand.u32 2147483647, %v260
        %vm268 = vcmp.lt.f32.partialorder %v267, 0.0004427343
        %v269 = vsel %vm268, %v266, %v263
        %v270 = vadd.f32 %v256, %v269
        %v271 = vlaneseq
        %v272 = vshrl.u32 %v271, 7
        %v273 = vlaneseq
        %v274 = vand.u32 %v273, 127
        %v275 = vsub.s32 %v274, %v272
        %v276 = vsub.s32 %v272, %v274
        %vm277 = vcmp.gt.s32.totalorder %v275, %v276
        %v278 = vsel %vm277, %v275, %v276
        %vm279 = vcmp.lt.s32.totalorder %v274, 8
        %vm280 = vcmp.le.s32.totalorder %v278, 5
        %vm281 = vmand %vm279, %vm280
        %vm282 = vcmp.gt.s32.totalorder %v278, 0
        %vm283 = vmand %vm281, %vm282
        %vm284 = vcmp.ge.s32.totalorder %v274, 8
        %vm285 = vcmp.lt.s32.totalorder %v274, 13
        %vm286 = vmand %vm284, %vm285
        %v287 = vsel %vm283, 0.0078125, 0.0
        %v288 = vsel %vm286, 0.0125, 0.0
        %v289 = vadd.f32 %v287, %v288
        %v290 = vmul.f32 %v289, %v270
        %v291 = vmul.f32 %v288, %v250
        %v292 = vadd.f32 %v290, %v291
        %vm293 = vcmask 130048
        %v294 = vsel %vm293, %v292, 0.0
        %295 = vadd.xlane.f32.xlu0 %v294
        %v296 = vpop.xlane.xlu0 %295
        %v297 = vrot.slane %v296, 4
        %v298 = vadd.f32 %v296, %v297
        %v299 = vrot.slane %v298, 2
        %v300 = vadd.f32 %v298, %v299
        %v301 = vrot.slane %v300, 1
        %v302 = vadd.f32 %v300, %v301
        %s303 = vtos %v302
        %v304 = vstv %s303
        %305 = vst [vmem:[%s198] sm:$0xff] %v304
        %s306 = sand.u32 %s82, 1
        %s307 = scalar_lea.sflag [#allocation4], %s306
        %s308 = sand.u32 %s82, 1
        %s309 = smul.addr %s308, 8
        %s310 = scalar_lea.vmem [#allocation7], %s309
        // Predicated region
        $region37: #{tpu_custom_call.1} parent=27 // pred_check
          %p311 = pneg %p92
        $region38: #{tpu_custom_call.1} parent=27 // pred_check_branch
          %313 = sbr.rel (%p311) target = $region40
        $region39: #{tpu_custom_call.1} parent=27 // pred_region
          %s315 = ssub.s32 128, 128
          %316 = vsyncadd %s307, %s315
          %s317 = smul.addr %s22, 128
          %s318 = scalar_lea.hbm %s2, %s317
          %s320 = sshll.u32 %s310, 4
          %s321 = int_to_ptr.vmem [resolvable:$true] %s320
          %323 = dma.vmem_to_hbm [thread:$0]  %s321, 128, %s318, %s307
        $region40: #{tpu_custom_call.1} parent=27 // pred_fallthru
          _
      $region28: #{tpu_custom_call.1} parent=5 // pred_fallthru
        _
      %p324 = scmp.le.s32.totalorder 2, %s17
      // Predicated region
      $region41: #{tpu_custom_call.1} parent=5 // pred_check
        %p325 = pneg %p324
      $region42: #{tpu_custom_call.1} parent=5 // pred_check_branch
        %327 = sbr.rel (%p325) target = $region44
      $region43: #{tpu_custom_call.1} parent=5 // pred_region
        %s328 = ssub.s32 %s17, 2
        // Predicated region
        $region45: #{tpu_custom_call.1} parent=43 // pred_check
          %p329 = pneg %p98
        $region46: #{tpu_custom_call.1} parent=43 // pred_check_branch
          %331 = sbr.rel (%p329) target = $region48
        $region47: #{tpu_custom_call.1} parent=43 // pred_region
          %s332 = sand.u32 %s83, 1
          %s333 = scalar_lea.sflag [#allocation4], %s332
          %s334 = sand.u32 %s83, 1
          %s335 = smul.addr %s334, 8
          %s336 = scalar_lea.vmem [#allocation7], %s335
          %337 = dma.done %s333, 128
        $region48: #{tpu_custom_call.1} parent=43 // pred_fallthru
          _
      $region44: #{tpu_custom_call.1} parent=5 // pred_fallthru
        _
    $region6: #{tpu_custom_call.1} parent=1 // loop_footer
      %s21 = sadd.s32 1, %s17
    $region7: #{tpu_custom_call.1} parent=1 // loop_footer_branch
      %16 = sbr.rel target = $region3
    $region8: #{tpu_custom_call.1} parent=1 // loop_exit
      _
    %338 = vsyncpa [#allocation3], 1
    %s339 = scalar_lea.sflag [#allocation3], 1
    %340 = vsyncpa %s339, 1
    %341 = vsyncpa [#allocation6], 1
    %s342 = scalar_lea.sflag [#allocation6], 1
    %343 = vsyncpa %s342, 1
    %344 = vsyncpa [#allocation4], 1
    %s345 = scalar_lea.sflag [#allocation4], 1
    %346 = vsyncpa %s345, 1

</llo_original>
